<compile_context>
chip_gen: v5e
topology: v5e:2x2
jax: 0.10.0
libtpu: 0.0.40
codegen_flags: <defaults>
</compile_context>

<pallas_src>
import jax
import jax.numpy as jnp
from jax.experimental import pallas as pl
from jax.experimental.pallas import tpu as pltpu

SIZES = (10, 8, 5)            # categorical vocab widths (sizes arg of TrainingModel)
N_CONT = 3                    # Linear(6,1) => 3 categorical outputs + 3 continuous feats
N_FEAT = sum(SIZES) + N_CONT  # 26 fused features
BATCH = 8
B_TILE = 512                  # lane-axis block for the gridded (large-batch) path


def _gemv_kernel(xt_ref, w_ref, o_ref):
    # xt_ref: (F, B_tile)  features on sublanes, batch on lanes (lane-dense)
    # w_ref : (F, 1)       effective weight column, broadcast along lanes
    # o_ref : (1, B_tile)  lane-dense output (unmasked vst)
    # VPU multiply + XLU sublane reduce; deliberately no MXU for this N=1 shape.
    o_ref[...] = jnp.sum(xt_ref[...] * w_ref[...], axis=0, keepdims=True)


def fold_params(params):
    """One-time fold of the two-stage Linear chain into a single GEMV.

    Call once per parameter set and reuse the result across forward calls.
      w_eff = concat(w_cat0*wl[0], w_cat1*wl[1], w_cat2*wl[2], wl[3:6])  (26, 1)
      b_eff = b0*wl[0] + b1*wl[1] + b2*wl[2] + lin_b                      scalar
    Algebraically exact modulo f32 reassociation (covered by 1e-5 tolerance).
    """
    wl = params["lin_w"]                                     # (6, 1)
    w_eff = jnp.concatenate(
        [params["w_cat0"] * wl[0, 0],
         params["w_cat1"] * wl[1, 0],
         params["w_cat2"] * wl[2, 0],
         wl[3:6, :]],
        axis=0)                                              # (26, 1)
    b_eff = (params["b_cat0"][0] * wl[0, 0]
             + params["b_cat1"][0] * wl[1, 0]
             + params["b_cat2"][0] * wl[2, 0]
             + params["lin_b"][0])                           # () scalar
    return w_eff, b_eff


@jax.jit
def training_model_forward(x_series, x_genre, x_esrb, x_cont, w_eff, b_eff):
    """JAX/Pallas equivalent of TrainingModel.forward (folded params)."""
    B = x_series.shape[0]

    # Fused, lane-dense activation: (26, B) with batch on the lane axis.
    # Under jit this concat/transpose fuses with the surrounding dispatch.
    x_t = jnp.concatenate([x_series, x_genre, x_esrb, x_cont], axis=1).T
    F = x_t.shape[0]

    if B % B_TILE == 0 and B // B_TILE >= 2:
        # Production path: 1-D grid over the batch (lane) axis.
        out = pl.pallas_call(
            _gemv_kernel,
            out_shape=jax.ShapeDtypeStruct((1, B), jnp.float32),
            grid=(B // B_TILE,),
            in_specs=[pl.BlockSpec((F, B_TILE), lambda i: (0, i)),
                      pl.BlockSpec((F, 1), lambda i: (0, 0))],
            out_specs=pl.BlockSpec((1, B_TILE), lambda i: (0, i)),
            compiler_params=pltpu.CompilerParams(
                dimension_semantics=("parallel",)),  # v7x: shard blocks over 2 TCs
        )(x_t, w_eff)
    else:
        # Tiny-batch path: single full-array block (fixed-overhead bound).
        vmem = pl.BlockSpec(memory_space=pltpu.MemorySpace.VMEM)
        out = pl.pallas_call(
            _gemv_kernel,
            out_shape=jax.ShapeDtypeStruct((1, B), jnp.float32),
            in_specs=[vmem, vmem],
            out_specs=vmem,
        )(x_t, w_eff)

    # Scalar bias add + squeeze fuse into the jitted epilogue.
    return jnp.squeeze(out, axis=0) + b_eff


def ref_forward(x_series, x_genre, x_esrb, x_cont, params):
    """Pure-JAX reference mirroring the PyTorch code exactly."""
    y0 = x_series @ params["w_cat0"] + params["b_cat0"]
    y1 = x_genre @ params["w_cat1"] + params["b_cat1"]
    y2 = x_esrb @ params["w_cat2"] + params["b_cat2"]
    cat = jnp.concatenate([y0, y1, y2, x_cont], axis=1)      # (B, 6)
    return jnp.squeeze(cat @ params["lin_w"] + params["lin_b"])


def init_params(key):
    """Deterministic parameter init (uniform, Linear-style fan-in scaling)."""
    keys = jax.random.split(key, 8)
    params = {}
    for i, s in enumerate(SIZES):
        bound = 1.0 / jnp.sqrt(float(s))
        params[f"w_cat{i}"] = jax.random.uniform(
            keys[2 * i], (s, 1), jnp.float32, -bound, bound)
        params[f"b_cat{i}"] = jax.random.uniform(
            keys[2 * i + 1], (1,), jnp.float32, -bound, bound)
    bound = 1.0 / jnp.sqrt(6.0)
    params["lin_w"] = jax.random.uniform(keys[6], (6, 1), jnp.float32, -bound, bound)
    params["lin_b"] = jax.random.uniform(keys[7], (1,), jnp.float32, -bound, bound)
    return params


def _make_inputs(key, batch):
    k0, k1, k2, kc = jax.random.split(key, 4)
    x_series = jax.random.normal(k0, (batch, SIZES[0]), jnp.float32)
    x_genre = jax.random.normal(k1, (batch, SIZES[1]), jnp.float32)
    x_esrb = jax.random.normal(k2, (batch, SIZES[2]), jnp.float32)
    x_cont = jax.random.normal(kc, (batch, N_CONT), jnp.float32)
    return x_series, x_genre, x_esrb, x_cont


if __name__ == "__main__":
    key = jax.random.PRNGKey(0)
    k_p, k_small, k_big = jax.random.split(key, 3)

    params = init_params(k_p)
    # Hoisted, one-time parameter fold (reused for every forward call below).
    w_eff, b_eff = fold_params(params)

    # --- Small-batch path (module-scale shapes, gridless block) ---
    xs = _make_inputs(k_small, BATCH)
    out = training_model_forward(*xs, w_eff, b_eff)
    out = jax.block_until_ready(out)
    expected = ref_forward(*xs, params)
    assert out.shape == (BATCH,), out.shape
    assert jnp.allclose(out, expected, rtol=1e-5, atol=1e-5), (out, expected)

    # --- Large-batch path (exercises the 1-D lane-axis grid + parallel TCs) ---
    B_BIG = 4 * B_TILE
    xs_big = _make_inputs(k_big, B_BIG)
    out_big = training_model_forward(*xs_big, w_eff, b_eff)
    out_big = jax.block_until_ready(out_big)
    expected_big = ref_forward(*xs_big, params)
    assert out_big.shape == (B_BIG,), out_big.shape
    assert jnp.allclose(out_big, expected_big, rtol=1e-5, atol=1e-5)

    print("KERNEL_OK")
</pallas_src>

<mosaic_0001>
module attributes {stable_mosaic.version = 11 : i64} {
  func.func @_gemv_kernel(%arg0: memref<26x8xf32, #tpu.memory_space<vmem>>, %arg1: memref<26x1xf32, #tpu.memory_space<vmem>>, %arg2: memref<1x8xf32, #tpu.memory_space<vmem>>) attributes {dimension_semantics = [], scalar_prefetch = 0 : i64, scratch_operands = 0 : i64, tpu.core_type = #tpu.core_type<tc>} {
    %c0 = arith.constant 0 : index
    %c0_0 = arith.constant 0 : index
    %0 = vector.load %arg0[%c0, %c0_0] : memref<26x8xf32, #tpu.memory_space<vmem>>, vector<26x8xf32>
    %c0_1 = arith.constant 0 : index
    %c0_2 = arith.constant 0 : index
    %1 = vector.load %arg1[%c0_1, %c0_2] : memref<26x1xf32, #tpu.memory_space<vmem>>, vector<26x1xf32>
    %2 = vector.broadcast %1 : vector<26x1xf32> to vector<26x8xf32>
    %3 = arith.mulf %0, %2 : vector<26x8xf32>
    %cst = arith.constant dense<0.000000e+00> : vector<8xf32>
    %4 = vector.multi_reduction <add>, %3, %cst [0] : vector<26x8xf32> to vector<8xf32>
    %5 = vector.shape_cast %4 : vector<8xf32> to vector<1x8xf32>
    %c0_3 = arith.constant 0 : index
    %c0_4 = arith.constant 0 : index
    %6 = vector.load %arg2[%c0_3, %c0_4] : memref<1x8xf32, #tpu.memory_space<vmem>>, vector<1x8xf32>
    tpu.vector_store %arg2[%c0_3, %c0_4], %5 {strides = array<i32>} : memref<1x8xf32, #tpu.memory_space<vmem>>, vector<1x8xf32>,
    return
  }
}

</mosaic_0001>

<llo_original>
// kernel: training_model_forward.1
$region0: #{training_model_forward.1}
  #allocation0 [shape = 'u32[]', space=smem, size = 0x4, offset = 0x4, fixed_abs, tag = 'smem constant byte address 0x4 - core index']
  #allocation1 [shape = 'u32[72,128]{1,0:T(1,128)}', space=vmem, size = 0x9000, scoped, tag = 'internal scratch']
  %s0 = inlined_call_operand.vmem [shape: f32[26,8], index: 0, kind: input, shape index: {}]
  %s1 = inlined_call_operand.vmem [shape: f32[26,1], index: 1, kind: input, shape index: {}]
  %s2 = inlined_call_operand.vmem [shape: f32[1,8], index: 2, kind: output, shape index: {}]
  %s3 = sld [smem:[#allocation0]]
  $region18: #{training_model_forward.1} parent=0
    _
  %s5 = ssub.s32 1, %s3
  %s6 = scalar_select 0, %s5, %s3
  // Predicated region
  $region2: #{training_model_forward.1} parent=0 // pred_check
    _
  $region3: #{training_model_forward.1} parent=0 // pred_check_branch
    %8 = sbr.rel (0) target = $region5
  $region4: #{training_model_forward.1} parent=0 // pred_region
    _
  $region5: #{training_model_forward.1} parent=0 // pred_fallthru
    _
  // Predicated region
  $region6: #{training_model_forward.1} parent=0 // pred_check
    _
  $region7: #{training_model_forward.1} parent=0 // pred_check_branch
    %10 = sbr.rel (0) target = $region9
  $region8: #{training_model_forward.1} parent=0 // pred_region
    _
  $region9: #{training_model_forward.1} parent=0 // pred_fallthru
    _
  %v11 = vld [vmem:[%s0] sm:$0xff]
  %v12 = vld [vmem:[%s0 + $0x8] sm:$0xff]
  %v13 = vld [vmem:[%s0 + $0x10] sm:$0xff]
  %v14 = vld [vmem:[%s0 + $0x18] sm:$0x3]
  %v15 = vld [vmem:[%s1] sm:$0xff]
  %v16 = vld [vmem:[%s1 + $0x8] sm:$0xff]
  %v17 = vld [vmem:[%s1 + $0x10] sm:$0xff]
  %v18 = vld [vmem:[%s1 + $0x18] sm:$0x3]
  %20 = vset.pattern.permute.xlu0 0
  %21 = vperm.xlu0 %20, %v15
  %v22 = vpop.permute.xlu0 %21
  %25 = vset.pattern.permute.xlu0 0
  %26 = vperm.xlu0 %25, %v16
  %v27 = vpop.permute.xlu0 %26
  %30 = vset.pattern.permute.xlu0 0
  %31 = vperm.xlu0 %30, %v17
  %v32 = vpop.permute.xlu0 %31
  %35 = vset.pattern.permute.xlu0 0
  %36 = vperm.xlu0 %35, %v18
  %v37 = vpop.permute.xlu0 %36
  %v39 = vmul.f32 %v11, %v22
  %v40 = vmul.f32 %v12, %v27
  %v41 = vmul.f32 %v13, %v32
  %v42 = vmul.f32 %v14, %v37
  %vm43 = vcmask 64512
  %v44 = vsel %vm43, %v39, 0.0
  %v45 = vsel %vm43, %v40, 0.0
  %v46 = vadd.f32 %v44, %v45
  %v47 = vsel %vm43, %v41, 0.0
  %v48 = vadd.f32 %v46, %v47
  %vm49 = vcmask 58368
  %v50 = vsel %vm49, %v42, 0.0
  %v51 = vadd.f32 %v48, %v50
  %v52 = vrot.slane %v51, 4
  %v53 = vadd.f32 %v51, %v52
  %v54 = vrot.slane %v53, 2
  %v55 = vadd.f32 %v53, %v54
  %v56 = vrot.slane %v55, 1
  %v57 = vadd.f32 %v55, %v56
  %vm58 = vcmask 57344
  %59 = vst.msk [vmem:[%s2] sm:$0x1] %vm58, %v57
  // Predicated region
  $region10: #{training_model_forward.1} parent=0 // pred_check
    _
  $region11: #{training_model_forward.1} parent=0 // pred_check_branch
    %61 = sbr.rel (0) target = $region13
  $region12: #{training_model_forward.1} parent=0 // pred_region
    _
  $region13: #{training_model_forward.1} parent=0 // pred_fallthru
    _
  // Predicated region
  $region14: #{training_model_forward.1} parent=0 // pred_check
    _
  $region15: #{training_model_forward.1} parent=0 // pred_check_branch
    %63 = sbr.rel (0) target = $region17
  $region16: #{training_model_forward.1} parent=0 // pred_region
    _
  $region17: #{training_model_forward.1} parent=0 // pred_fallthru
    _

</llo_original>
